<compile_context>
chip_gen: v7x
topology: tpu7x:2x2x1
jax: 0.10.0
libtpu: 0.0.40
codegen_flags: <defaults>
</compile_context>

<pallas_src>
import jax
import jax.numpy as jnp
from jax import lax
from jax.experimental import pallas as pl
from jax.experimental.pallas import tpu as pltpu


def _round_up(x, m):
    return ((x + m - 1) // m) * m


def _make_neg_pearson_kernel(n_total, bb, bt):
    """Kernel factory: n_total = true T (static), bb/bt = block sizes."""
    n_slabs = bt // 128      # 128-lane slabs per T tile
    n_rowgroups = bb // 8    # 8-sublane row groups per B tile

    def kernel(p_ref, t_ref, o_ref, acc_x, acc_y, acc_xy, acc_x2, acc_y2):
        ti = pl.program_id(1)

        # ---- init accumulators on the first T step of each B block --------
        @pl.when(ti == 0)
        def _init():
            z = jnp.zeros((bb, 128), jnp.float32)
            acc_x[...] = z
            acc_y[...] = z
            acc_xy[...] = z
            acc_x2[...] = z
            acc_y2[...] = z

        # ---- accumulate this (bb, bt) tile: VPU-only elementwise adds ------
        # Each 8-row group keeps its 5 accumulator vregs live across the
        # statically unrolled slab loop (1 scratch load + 1 store per acc).
        @pl.loop(0, n_rowgroups)
        def _rows(g):
            r = pl.multiple_of(g * 8, 8)
            rows = pl.ds(r, 8)
            sx = acc_x[rows, :]
            sy = acc_y[rows, :]
            sxy = acc_xy[rows, :]
            sx2 = acc_x2[rows, :]
            sy2 = acc_y2[rows, :]
            for s in range(n_slabs):           # static unroll over lane slabs
                lanes = pl.ds(s * 128, 128)
                ps = p_ref[rows, lanes].astype(jnp.float32)
                ts = t_ref[rows, lanes].astype(jnp.float32)
                sx = sx + ps
                sy = sy + ts
                sxy = sxy + ps * ts
                sx2 = sx2 + ps * ps
                sy2 = sy2 + ts * ts
            acc_x[rows, :] = sx
            acc_y[rows, :] = sy
            acc_xy[rows, :] = sxy
            acc_x2[rows, :] = sx2
            acc_y2[rows, :] = sy2

        # ---- finalize on the last T step: single cross-lane reduction ------
        @pl.when(ti == pl.num_programs(1) - 1)
        def _finalize():
            n = jnp.float32(n_total)
            sx = jnp.sum(acc_x[...], axis=1, keepdims=True)    # (bb, 1)
            sy = jnp.sum(acc_y[...], axis=1, keepdims=True)
            sxy = jnp.sum(acc_xy[...], axis=1, keepdims=True)
            sx2 = jnp.sum(acc_x2[...], axis=1, keepdims=True)
            sy2 = jnp.sum(acc_y2[...], axis=1, keepdims=True)
            num = n * sxy - sx * sy
            var_x = n * sx2 - sx * sx
            var_y = n * sy2 - sy * sy
            pearson = num * lax.rsqrt(var_x * var_y)
            o_ref[...] = 1.0 - pearson                          # per-row loss

    return kernel


def phynet_loss(predictions, targets, *, block_b=256, block_t=2048):
    """JAX wrapper matching PhyNetLoss.forward (NegPearsonLoss)."""
    if predictions.ndim == 1:
        predictions = predictions.reshape(1, -1)
    if targets.ndim == 1:
        targets = targets.reshape(1, -1)
    assert predictions.shape == targets.shape, "shape mismatch"
    B, T = predictions.shape

    # ---- pick padded sizes & tile sizes (lane mult of 128, sublane mult 8) --
    T128 = _round_up(T, 128)
    n_t = pl.cdiv(T128, block_t)
    bt = _round_up(pl.cdiv(T128, n_t), 128)
    T_pad = n_t * bt

    B8 = _round_up(B, 8)
    n_b = pl.cdiv(B8, block_b)
    bb = _round_up(pl.cdiv(B8, n_b), 8)
    B_pad = n_b * bb

    p, t = predictions, targets          # keep narrow dtype in HBM
    if (B_pad, T_pad) != (B, T):
        p = jnp.pad(p, ((0, B_pad - B), (0, T_pad - T)))
        t = jnp.pad(t, ((0, B_pad - B), (0, T_pad - T)))

    kernel = _make_neg_pearson_kernel(n_total=T, bb=bb, bt=bt)

    in_bytes = p.size * p.dtype.itemsize + t.size * t.dtype.itemsize
    cost = pl.CostEstimate(
        flops=8 * B_pad * T_pad,
        transcendentals=B_pad,
        bytes_accessed=in_bytes + 4 * B_pad,
    )

    # Raise the VMEM limit only if the double-buffered footprint needs it
    # (keeps headroom on v7x's 64 MiB physical VMEM).
    est_vmem = (2 * bb * bt * (p.dtype.itemsize + t.dtype.itemsize)
                + 5 * bb * 128 * 4 + 2 * bb * 4)
    cp_kwargs = dict(dimension_semantics=("parallel", "arbitrary"))
    if est_vmem > (12 << 20):
        cp_kwargs["vmem_limit_bytes"] = min(est_vmem + (8 << 20), 48 << 20)

    per_row = pl.pallas_call(
        kernel,
        out_shape=jax.ShapeDtypeStruct((B_pad, 1), jnp.float32),
        grid_spec=pltpu.PrefetchScalarGridSpec(
            num_scalar_prefetch=0,
            grid=(n_b, n_t),
            in_specs=[
                pl.BlockSpec((bb, bt), lambda bi, ti: (bi, ti)),
                pl.BlockSpec((bb, bt), lambda bi, ti: (bi, ti)),
            ],
            out_specs=pl.BlockSpec((bb, 1), lambda bi, ti: (bi, 0)),
            scratch_shapes=[pltpu.VMEM((bb, 128), jnp.float32)] * 5,
        ),
        compiler_params=pltpu.CompilerParams(**cp_kwargs),
        cost_estimate=cost,
    )(p, t)

    # Mean over the true batch rows only (zero-padded rows are invalid).
    return jnp.mean(per_row[:B, 0])


def _reference_loss(predictions, targets):
    """Pure-JAX reference mirroring the PyTorch NegPearsonLoss loop."""
    if predictions.ndim == 1:
        predictions = predictions.reshape(1, -1)
    if targets.ndim == 1:
        targets = targets.reshape(1, -1)
    p = predictions.astype(jnp.float32)
    t = targets.astype(jnp.float32)
    n = p.shape[1]
    sx = jnp.sum(p, axis=1)
    sy = jnp.sum(t, axis=1)
    sxy = jnp.sum(p * t, axis=1)
    sx2 = jnp.sum(p * p, axis=1)
    sy2 = jnp.sum(t * t, axis=1)
    pearson = (n * sxy - sx * sy) / jnp.sqrt(
        (n * sx2 - sx * sx) * (n * sy2 - sy * sy))
    return jnp.mean(1.0 - pearson)


if __name__ == "__main__":
    key = jax.random.PRNGKey(0)
    k1, k2, k3, k4 = jax.random.split(key, 4)

    # Test 1: small batch, single grid step (B pads 6->8, T pads 500->512).
    B, T = 6, 500
    pred = jax.random.normal(k1, (B, T), dtype=jnp.float32)
    targ = 0.7 * pred + 0.3 * jax.random.normal(k2, (B, T), dtype=jnp.float32)
    loss = phynet_loss(pred, targ)
    jax.block_until_ready(loss)
    ref = _reference_loss(pred, targ)
    assert jnp.allclose(loss, ref, atol=1e-5, rtol=1e-5), (loss, ref)

    # Test 2: multi-step grid over both axes (exercises the accumulators).
    B2, T2 = 10, 700
    pred2 = jax.random.normal(k3, (B2, T2), dtype=jnp.float32)
    targ2 = 0.5 * pred2 + 0.5 * jax.random.normal(k4, (B2, T2), dtype=jnp.float32)
    loss2 = phynet_loss(pred2, targ2, block_b=8, block_t=256)
    jax.block_until_ready(loss2)
    ref2 = _reference_loss(pred2, targ2)
    assert jnp.allclose(loss2, ref2, atol=1e-5, rtol=1e-5), (loss2, ref2)

    # Test 3: 1-D inputs (the .view(1, -1) path), bf16 kept narrow in HBM.
    pred3 = jax.random.normal(k1, (256,), dtype=jnp.bfloat16)
    targ3 = jax.random.normal(k2, (256,), dtype=jnp.bfloat16)
    loss3 = phynet_loss(pred3, targ3)
    jax.block_until_ready(loss3)
    ref3 = _reference_loss(pred3, targ3)
    assert jnp.allclose(loss3, ref3, atol=3e-3, rtol=3e-3), (loss3, ref3)

    print("KERNEL_OK")
</pallas_src>

<mosaic_0001>
module attributes {stable_mosaic.version = 11 : i64} {
  func.func @kernel(%arg0: i32, %arg1: i32, %arg2: memref<8x512xf32, #tpu.memory_space<vmem>>, %arg3: memref<8x512xf32, #tpu.memory_space<vmem>>, %arg4: memref<8x1xf32, #tpu.memory_space<vmem>>, %arg5: memref<8x128xf32, #tpu.memory_space<vmem>>, %arg6: memref<8x128xf32, #tpu.memory_space<vmem>>, %arg7: memref<8x128xf32, #tpu.memory_space<vmem>>, %arg8: memref<8x128xf32, #tpu.memory_space<vmem>>, %arg9: memref<8x128xf32, #tpu.memory_space<vmem>>) attributes {dimension_semantics = [#tpu.dimension_semantics<parallel>, #tpu.dimension_semantics<arbitrary>], iteration_bounds = array<i64: 1, 1>, scalar_prefetch = 0 : i64, scratch_operands = 5 : i64, tpu.core_type = #tpu.core_type<tc>, window_params = [{transform_indices = @transform_0, window_bounds = array<i64: 8, 512>}, {transform_indices = @transform_1, window_bounds = array<i64: 8, 512>}, {transform_indices = @transform_2, window_bounds = array<i64: 8, 1>}]} {
    %c0_i32 = arith.constant 0 : i32
    %0 = arith.cmpi eq, %arg1, %c0_i32 : i32
    %1 = arith.extui %0 : i1 to i32
    %c0_i32_0 = arith.constant 0 : i32
    %2 = arith.cmpi ne, %1, %c0_i32_0 : i32
    scf.if %2 {
      %cst = arith.constant 0.000000e+00 : f32
      %78 = vector.broadcast %cst : f32 to vector<8x128xf32>
      %c0_20 = arith.constant 0 : index
      %c0_21 = arith.constant 0 : index
      %79 = vector.load %arg5[%c0_20, %c0_21] : memref<8x128xf32, #tpu.memory_space<vmem>>, vector<8x128xf32>
      tpu.vector_store %arg5[%c0_20, %c0_21], %78 {strides = array<i32>} : memref<8x128xf32, #tpu.memory_space<vmem>>, vector<8x128xf32>,
      %c0_22 = arith.constant 0 : index
      %c0_23 = arith.constant 0 : index
      %80 = vector.load %arg6[%c0_22, %c0_23] : memref<8x128xf32, #tpu.memory_space<vmem>>, vector<8x128xf32>
      tpu.vector_store %arg6[%c0_22, %c0_23], %78 {strides = array<i32>} : memref<8x128xf32, #tpu.memory_space<vmem>>, vector<8x128xf32>,
      %c0_24 = arith.constant 0 : index
      %c0_25 = arith.constant 0 : index
      %81 = vector.load %arg7[%c0_24, %c0_25] : memref<8x128xf32, #tpu.memory_space<vmem>>, vector<8x128xf32>
      tpu.vector_store %arg7[%c0_24, %c0_25], %78 {strides = array<i32>} : memref<8x128xf32, #tpu.memory_space<vmem>>, vector<8x128xf32>,
      %c0_26 = arith.constant 0 : index
      %c0_27 = arith.constant 0 : index
      %82 = vector.load %arg8[%c0_26, %c0_27] : memref<8x128xf32, #tpu.memory_space<vmem>>, vector<8x128xf32>
      tpu.vector_store %arg8[%c0_26, %c0_27], %78 {strides = array<i32>} : memref<8x128xf32, #tpu.memory_space<vmem>>, vector<8x128xf32>,
      %c0_28 = arith.constant 0 : index
      %c0_29 = arith.constant 0 : index
      %83 = vector.load %arg9[%c0_28, %c0_29] : memref<8x128xf32, #tpu.memory_space<vmem>>, vector<8x128xf32>
      tpu.vector_store %arg9[%c0_28, %c0_29], %78 {strides = array<i32>} : memref<8x128xf32, #tpu.memory_space<vmem>>, vector<8x128xf32>,
    } else {
    }
    %c0_i32_1 = arith.constant 0 : i32
    %c1_i32 = arith.constant 1 : i32
    %3 = arith.muli %c0_i32_1, %c1_i32 : i32
    %c0_i32_2 = arith.constant 0 : i32
    %4 = arith.addi %c0_i32_2, %3 : i32
    %c8_i32 = arith.constant 8 : i32
    %5 = arith.muli %4, %c8_i32 : i32
    %6 = tpu.assume_multiple %5, 8 : i32
    %7 = arith.index_cast %6 : i32 to index
    %c0 = arith.constant 0 : index
    %8 = vector.load %arg5[%7, %c0] : memref<8x128xf32, #tpu.memory_space<vmem>>, vector<8x128xf32>
    %9 = arith.index_cast %6 : i32 to index
    %c0_3 = arith.constant 0 : index
    %10 = vector.load %arg6[%9, %c0_3] : memref<8x128xf32, #tpu.memory_space<vmem>>, vector<8x128xf32>
    %11 = arith.index_cast %6 : i32 to index
    %c0_4 = arith.constant 0 : index
    %12 = vector.load %arg7[%11, %c0_4] : memref<8x128xf32, #tpu.memory_space<vmem>>, vector<8x128xf32>
    %13 = arith.index_cast %6 : i32 to index
    %c0_5 = arith.constant 0 : index
    %14 = vector.load %arg8[%13, %c0_5] : memref<8x128xf32, #tpu.memory_space<vmem>>, vector<8x128xf32>
    %15 = arith.index_cast %6 : i32 to index
    %c0_6 = arith.constant 0 : index
    %16 = vector.load %arg9[%15, %c0_6] : memref<8x128xf32, #tpu.memory_space<vmem>>, vector<8x128xf32>
    %17 = arith.index_cast %6 : i32 to index
    %c0_7 = arith.constant 0 : index
    %18 = vector.load %arg2[%17, %c0_7] : memref<8x512xf32, #tpu.memory_space<vmem>>, vector<8x128xf32>
    %19 = arith.index_cast %6 : i32 to index
    %c0_8 = arith.constant 0 : index
    %20 = vector.load %arg3[%19, %c0_8] : memref<8x512xf32, #tpu.memory_space<vmem>>, vector<8x128xf32>
    %21 = arith.addf %8, %18 : vector<8x128xf32>
    %22 = arith.addf %10, %20 : vector<8x128xf32>
    %23 = arith.mulf %18, %20 : vector<8x128xf32>
    %24 = arith.addf %12, %23 : vector<8x128xf32>
    %25 = arith.mulf %18, %18 : vector<8x128xf32>
    %26 = arith.addf %14, %25 : vector<8x128xf32>
    %27 = arith.mulf %20, %20 : vector<8x128xf32>
    %28 = arith.addf %16, %27 : vector<8x128xf32>
    %29 = arith.index_cast %6 : i32 to index
    %c128 = arith.constant 128 : index
    %30 = vector.load %arg2[%29, %c128] : memref<8x512xf32, #tpu.memory_space<vmem>>, vector<8x128xf32>
    %31 = arith.index_cast %6 : i32 to index
    %c128_9 = arith.constant 128 : index
    %32 = vector.load %arg3[%31, %c128_9] : memref<8x512xf32, #tpu.memory_space<vmem>>, vector<8x128xf32>
    %33 = arith.addf %21, %30 : vector<8x128xf32>
    %34 = arith.addf %22, %32 : vector<8x128xf32>
    %35 = arith.mulf %30, %32 : vector<8x128xf32>
    %36 = arith.addf %24, %35 : vector<8x128xf32>
    %37 = arith.mulf %30, %30 : vector<8x128xf32>
    %38 = arith.addf %26, %37 : vector<8x128xf32>
    %39 = arith.mulf %32, %32 : vector<8x128xf32>
    %40 = arith.addf %28, %39 : vector<8x128xf32>
    %41 = arith.index_cast %6 : i32 to index
    %c256 = arith.constant 256 : index
    %42 = vector.load %arg2[%41, %c256] : memref<8x512xf32, #tpu.memory_space<vmem>>, vector<8x128xf32>
    %43 = arith.index_cast %6 : i32 to index
    %c256_10 = arith.constant 256 : index
    %44 = vector.load %arg3[%43, %c256_10] : memref<8x512xf32, #tpu.memory_space<vmem>>, vector<8x128xf32>
    %45 = arith.addf %33, %42 : vector<8x128xf32>
    %46 = arith.addf %34, %44 : vector<8x128xf32>
    %47 = arith.mulf %42, %44 : vector<8x128xf32>
    %48 = arith.addf %36, %47 : vector<8x128xf32>
    %49 = arith.mulf %42, %42 : vector<8x128xf32>
    %50 = arith.addf %38, %49 : vector<8x128xf32>
    %51 = arith.mulf %44, %44 : vector<8x128xf32>
    %52 = arith.addf %40, %51 : vector<8x128xf32>
    %53 = arith.index_cast %6 : i32 to index
    %c384 = arith.constant 384 : index
    %54 = vector.load %arg2[%53, %c384] : memref<8x512xf32, #tpu.memory_space<vmem>>, vector<8x128xf32>
    %55 = arith.index_cast %6 : i32 to index
    %c384_11 = arith.constant 384 : index
    %56 = vector.load %arg3[%55, %c384_11] : memref<8x512xf32, #tpu.memory_space<vmem>>, vector<8x128xf32>
    %57 = arith.addf %45, %54 : vector<8x128xf32>
    %58 = arith.addf %46, %56 : vector<8x128xf32>
    %59 = arith.mulf %54, %56 : vector<8x128xf32>
    %60 = arith.addf %48, %59 : vector<8x128xf32>
    %61 = arith.mulf %54, %54 : vector<8x128xf32>
    %62 = arith.addf %50, %61 : vector<8x128xf32>
    %63 = arith.mulf %56, %56 : vector<8x128xf32>
    %64 = arith.addf %52, %63 : vector<8x128xf32>
    %65 = arith.index_cast %6 : i32 to index
    %c0_12 = arith.constant 0 : index
    %66 = vector.load %arg5[%65, %c0_12] : memref<8x128xf32, #tpu.memory_space<vmem>>, vector<8x128xf32>
    tpu.vector_store %arg5[%65, %c0_12], %57 {strides = array<i32>} : memref<8x128xf32, #tpu.memory_space<vmem>>, vector<8x128xf32>,
    %67 = arith.index_cast %6 : i32 to index
    %c0_13 = arith.constant 0 : index
    %68 = vector.load %arg6[%67, %c0_13] : memref<8x128xf32, #tpu.memory_space<vmem>>, vector<8x128xf32>
    tpu.vector_store %arg6[%67, %c0_13], %58 {strides = array<i32>} : memref<8x128xf32, #tpu.memory_space<vmem>>, vector<8x128xf32>,
    %69 = arith.index_cast %6 : i32 to index
    %c0_14 = arith.constant 0 : index
    %70 = vector.load %arg7[%69, %c0_14] : memref<8x128xf32, #tpu.memory_space<vmem>>, vector<8x128xf32>
    tpu.vector_store %arg7[%69, %c0_14], %60 {strides = array<i32>} : memref<8x128xf32, #tpu.memory_space<vmem>>, vector<8x128xf32>,
    %71 = arith.index_cast %6 : i32 to index
    %c0_15 = arith.constant 0 : index
    %72 = vector.load %arg8[%71, %c0_15] : memref<8x128xf32, #tpu.memory_space<vmem>>, vector<8x128xf32>
    tpu.vector_store %arg8[%71, %c0_15], %62 {strides = array<i32>} : memref<8x128xf32, #tpu.memory_space<vmem>>, vector<8x128xf32>,
    %73 = arith.index_cast %6 : i32 to index
    %c0_16 = arith.constant 0 : index
    %74 = vector.load %arg9[%73, %c0_16] : memref<8x128xf32, #tpu.memory_space<vmem>>, vector<8x128xf32>
    tpu.vector_store %arg9[%73, %c0_16], %64 {strides = array<i32>} : memref<8x128xf32, #tpu.memory_space<vmem>>, vector<8x128xf32>,
    %c1_i32_17 = arith.constant 1 : i32
    %c0_i32_18 = arith.constant 0 : i32
    %75 = arith.cmpi eq, %arg1, %c0_i32_18 : i32
    %76 = arith.extui %75 : i1 to i32
    %c0_i32_19 = arith.constant 0 : i32
    %77 = arith.cmpi ne, %76, %c0_i32_19 : i32
    scf.if %77 {
      %c0_20 = arith.constant 0 : index
      %c0_21 = arith.constant 0 : index
      %78 = vector.load %arg5[%c0_20, %c0_21] : memref<8x128xf32, #tpu.memory_space<vmem>>, vector<8x128xf32>
      %cst = arith.constant dense<0.000000e+00> : vector<8xf32>
      %79 = vector.multi_reduction <add>, %78, %cst [1] : vector<8x128xf32> to vector<8xf32>
      %80 = vector.shape_cast %79 : vector<8xf32> to vector<8x1xf32>
      %c0_22 = arith.constant 0 : index
      %c0_23 = arith.constant 0 : index
      %81 = vector.load %arg6[%c0_22, %c0_23] : memref<8x128xf32, #tpu.memory_space<vmem>>, vector<8x128xf32>
      %cst_24 = arith.constant dense<0.000000e+00> : vector<8xf32>
      %82 = vector.multi_reduction <add>, %81, %cst_24 [1] : vector<8x128xf32> to vector<8xf32>
      %83 = vector.shape_cast %82 : vector<8xf32> to vector<8x1xf32>
      %c0_25 = arith.constant 0 : index
      %c0_26 = arith.constant 0 : index
      %84 = vector.load %arg7[%c0_25, %c0_26] : memref<8x128xf32, #tpu.memory_space<vmem>>, vector<8x128xf32>
      %cst_27 = arith.constant dense<0.000000e+00> : vector<8xf32>
      %85 = vector.multi_reduction <add>, %84, %cst_27 [1] : vector<8x128xf32> to vector<8xf32>
      %86 = vector.shape_cast %85 : vector<8xf32> to vector<8x1xf32>
      %c0_28 = arith.constant 0 : index
      %c0_29 = arith.constant 0 : index
      %87 = vector.load %arg8[%c0_28, %c0_29] : memref<8x128xf32, #tpu.memory_space<vmem>>, vector<8x128xf32>
      %cst_30 = arith.constant dense<0.000000e+00> : vector<8xf32>
      %88 = vector.multi_reduction <add>, %87, %cst_30 [1] : vector<8x128xf32> to vector<8xf32>
      %89 = vector.shape_cast %88 : vector<8xf32> to vector<8x1xf32>
      %c0_31 = arith.constant 0 : index
      %c0_32 = arith.constant 0 : index
      %90 = vector.load %arg9[%c0_31, %c0_32] : memref<8x128xf32, #tpu.memory_space<vmem>>, vector<8x128xf32>
      %cst_33 = arith.constant dense<0.000000e+00> : vector<8xf32>
      %91 = vector.multi_reduction <add>, %90, %cst_33 [1] : vector<8x128xf32> to vector<8xf32>
      %92 = vector.shape_cast %91 : vector<8xf32> to vector<8x1xf32>
      %cst_34 = arith.constant 5.000000e+02 : f32
      %93 = vector.broadcast %cst_34 : f32 to vector<8x1xf32>
      %94 = arith.mulf %93, %86 : vector<8x1xf32>
      %95 = arith.mulf %80, %83 : vector<8x1xf32>
      %96 = arith.subf %94, %95 : vector<8x1xf32>
      %cst_35 = arith.constant 5.000000e+02 : f32
      %97 = vector.broadcast %cst_35 : f32 to vector<8x1xf32>
      %98 = arith.mulf %97, %89 : vector<8x1xf32>
      %99 = arith.mulf %80, %80 : vector<8x1xf32>
      %100 = arith.subf %98, %99 : vector<8x1xf32>
      %cst_36 = arith.constant 5.000000e+02 : f32
      %101 = vector.broadcast %cst_36 : f32 to vector<8x1xf32>
      %102 = arith.mulf %101, %92 : vector<8x1xf32>
      %103 = arith.mulf %83, %83 : vector<8x1xf32>
      %104 = arith.subf %102, %103 : vector<8x1xf32>
      %105 = arith.mulf %100, %104 : vector<8x1xf32>
      %106 = math.rsqrt %105 : vector<8x1xf32>
      %107 = arith.mulf %96, %106 : vector<8x1xf32>
      %cst_37 = arith.constant 1.000000e+00 : f32
      %108 = vector.broadcast %cst_37 : f32 to vector<8x1xf32>
      %109 = arith.subf %108, %107 : vector<8x1xf32>
      %c0_38 = arith.constant 0 : index
      %c0_39 = arith.constant 0 : index
      %110 = vector.load %arg4[%c0_38, %c0_39] : memref<8x1xf32, #tpu.memory_space<vmem>>, vector<8x1xf32>
      tpu.vector_store %arg4[%c0_38, %c0_39], %109 {strides = array<i32>} : memref<8x1xf32, #tpu.memory_space<vmem>>, vector<8x1xf32>,
    } else {
    }
    return
  }
  func.func @transform_0(%arg0: i32, %arg1: i32) -> (i32, i32) {
    %c0_i32 = arith.constant 0 : i32
    return %arg0, %arg1 : i32, i32
  }
  func.func @transform_1(%arg0: i32, %arg1: i32) -> (i32, i32) {
    %c0_i32 = arith.constant 0 : i32
    return %arg0, %arg1 : i32, i32
  }
  func.func @transform_2(%arg0: i32, %arg1: i32) -> (i32, i32) {
    %c0_i32 = arith.constant 0 : i32
    %c0_i32_0 = arith.constant 0 : i32
    return %arg0, %c0_i32 : i32, i32
  }
}

</mosaic_0001>

<llo_original>
// kernel: tpu_custom_call.1
$region0: #{tpu_custom_call.1}
  #allocation0 [shape = 'u32[]', space=smem, size = 0x4, offset = 0x4, fixed_abs, tag = 'smem constant byte address 0x4 - core index']
  #allocation1 [shape = 'u32[144,128]{1,0:T(1,128)}', space=vmem, size = 0x12000, scoped, tag = 'internal scratch']
  #allocation2 [shape = 'f32[8,128]{1,0:T(8,128)}', space=vmem, size = 0x1000, scoped, tag = 'scratch operand']
  #allocation3 [shape = 'f32[8,128]{1,0:T(8,128)}', space=vmem, size = 0x1000, scoped, tag = 'scratch operand']
  #allocation4 [shape = 'f32[8,128]{1,0:T(8,128)}', space=vmem, size = 0x1000, scoped, tag = 'scratch operand']
  #allocation5 [shape = 'f32[8,128]{1,0:T(8,128)}', space=vmem, size = 0x1000, scoped, tag = 'scratch operand']
  #allocation6 [shape = 'f32[8,128]{1,0:T(8,128)}', space=vmem, size = 0x1000, scoped, tag = 'scratch operand']
  %s0 = inlined_call_operand.hbm [shape: f32[8,512], index: 0, kind: input, shape index: {}]
  %s1 = inlined_call_operand.hbm [shape: f32[8,512], index: 1, kind: input, shape index: {}]
  %s2 = inlined_call_operand.vmem [shape: f32[8,1], index: 2, kind: output, shape index: {}]
  %s3 = sld [smem:[#allocation0]]
  $region34: #{tpu_custom_call.1} parent=0
    _
  %s5 = ssub.s32 1, %s3
  %s6 = scalar_select 0, %s5, %s3
  $region1: #{tpu_custom_call.1} parent=0
    #allocation7 [shape = 'u8[16384]{0}', space=vmem, size = 0x4000, scoped, tag = 'input window, operand 0, single buffered']
    #allocation8 [shape = 's32[1]{0}', space=sflag, size = 0x4, scoped, tag = 'scoped memory for tpu_custom_call.1']
    #allocation9 [shape = 'u8[16384]{0}', space=vmem, size = 0x4000, scoped, tag = 'input window, operand 1, single buffered']
    #allocation10 [shape = 's32[1]{0}', space=sflag, size = 0x4, scoped, tag = 'scoped memory for tpu_custom_call.1']
    %7 = vsyncpa [#allocation8], 0
    %8 = vsyncpa [#allocation10], 0
    // Predicated region
    $region2: #{tpu_custom_call.1} parent=1 // pred_check
      _
    $region3: #{tpu_custom_call.1} parent=1 // pred_check_branch
      %10 = sbr.rel (0) target = $region5
    $region4: #{tpu_custom_call.1} parent=1 // pred_region
      %s12 = ssub.s32 512, 512
      %13 = vsyncadd [#allocation8], %s12
      %s15 = sshll.u32 [#allocation7], 4
      %s16 = int_to_ptr.vmem [resolvable:$true] %s15
      %18 = dma.hbm_to_vmem [thread:$0]  %s0, 512, %s16, [#allocation8]
    $region5: #{tpu_custom_call.1} parent=1 // pred_fallthru
      _
    // Predicated region
    $region6: #{tpu_custom_call.1} parent=1 // pred_check
      _
    $region7: #{tpu_custom_call.1} parent=1 // pred_check_branch
      %20 = sbr.rel (0) target = $region9
    $region8: #{tpu_custom_call.1} parent=1 // pred_region
      %s22 = ssub.s32 512, 512
      %23 = vsyncadd [#allocation10], %s22
      %s25 = sshll.u32 [#allocation9], 4
      %s26 = int_to_ptr.vmem [resolvable:$true] %s25
      %28 = dma.hbm_to_vmem [thread:$0]  %s1, 512, %s26, [#allocation10]
    $region9: #{tpu_custom_call.1} parent=1 // pred_fallthru
      _
    // Predicated region
    $region10: #{tpu_custom_call.1} parent=1 // pred_check
      _
    $region11: #{tpu_custom_call.1} parent=1 // pred_check_branch
      %30 = sbr.rel (0) target = $region13
    $region12: #{tpu_custom_call.1} parent=1 // pred_region
      %31 = dma.done [#allocation8], 512
    $region13: #{tpu_custom_call.1} parent=1 // pred_fallthru
      _
    // Predicated region
    $region14: #{tpu_custom_call.1} parent=1 // pred_check
      _
    $region15: #{tpu_custom_call.1} parent=1 // pred_check_branch
      %33 = sbr.rel (0) target = $region17
    $region16: #{tpu_custom_call.1} parent=1 // pred_region
      %34 = dma.done [#allocation10], 512
    $region17: #{tpu_custom_call.1} parent=1 // pred_fallthru
      _
    %p35 = scmp.eq.s32.totalorder 0, 0
    // Predicated region
    $region18: #{tpu_custom_call.1} parent=1 // pred_check
      %p36 = pneg %p35
    $region19: #{tpu_custom_call.1} parent=1 // pred_check_branch
      %38 = sbr.rel (%p36) target = $region21
    $region20: #{tpu_custom_call.1} parent=1 // pred_region
      %39 = vst [vmem:[#allocation2] sm:$0xff] 0.0
      %40 = vst [vmem:[#allocation3] sm:$0xff] 0.0
      %41 = vst [vmem:[#allocation4] sm:$0xff] 0.0
      %42 = vst [vmem:[#allocation5] sm:$0xff] 0.0
      %43 = vst [vmem:[#allocation6] sm:$0xff] 0.0
    $region21: #{tpu_custom_call.1} parent=1 // pred_fallthru
      _
    %v44 = vld [vmem:[#allocation2] sm:$0xff]
    %v45 = vld [vmem:[#allocation3] sm:$0xff]
    %v46 = vld [vmem:[#allocation4] sm:$0xff]
    %v47 = vld [vmem:[#allocation5] sm:$0xff]
    %v48 = vld [vmem:[#allocation6] sm:$0xff]
    %s49 = smul.u32 0, 4
    %s50 = smul.addr %s49, 8
    %s51 = scalar_lea.vmem [#allocation7], %s50
    %v52 = vld [vmem:[%s51] sm:$0xff]
    %s53 = smul.addr %s49, 8
    %s54 = scalar_lea.vmem [#allocation9], %s53
    %v55 = vld [vmem:[%s54] sm:$0xff]
    %v56 = vadd.f32 %v44, %v52
    %v57 = vadd.f32 %v45, %v55
    %v58 = vmul.f32 %v52, %v55
    %v59 = vadd.f32 %v46, %v58
    %v60 = vmul.f32 %v52, %v52
    %v61 = vadd.f32 %v47, %v60
    %v62 = vmul.f32 %v55, %v55
    %v63 = vadd.f32 %v48, %v62
    %v64 = vld [vmem:[%s51 + $0x8] sm:$0xff]
    %v65 = vld [vmem:[%s54 + $0x8] sm:$0xff]
    %v66 = vadd.f32 %v56, %v64
    %v67 = vadd.f32 %v57, %v65
    %v68 = vmul.f32 %v64, %v65
    %v69 = vadd.f32 %v59, %v68
    %v70 = vmul.f32 %v64, %v64
    %v71 = vadd.f32 %v61, %v70
    %v72 = vmul.f32 %v65, %v65
    %v73 = vadd.f32 %v63, %v72
    %v74 = vld [vmem:[%s51 + $0x10] sm:$0xff]
    %v75 = vld [vmem:[%s54 + $0x10] sm:$0xff]
    %v76 = vadd.f32 %v66, %v74
    %v77 = vadd.f32 %v67, %v75
    %v78 = vmul.f32 %v74, %v75
    %v79 = vadd.f32 %v69, %v78
    %v80 = vmul.f32 %v74, %v74
    %v81 = vadd.f32 %v71, %v80
    %v82 = vmul.f32 %v75, %v75
    %v83 = vadd.f32 %v73, %v82
    %v84 = vld [vmem:[%s51 + $0x18] sm:$0xff]
    %v85 = vld [vmem:[%s54 + $0x18] sm:$0xff]
    %v86 = vadd.f32 %v76, %v84
    %v87 = vadd.f32 %v77, %v85
    %v88 = vmul.f32 %v84, %v85
    %v89 = vadd.f32 %v79, %v88
    %v90 = vmul.f32 %v84, %v84
    %v91 = vadd.f32 %v81, %v90
    %v92 = vmul.f32 %v85, %v85
    %v93 = vadd.f32 %v83, %v92
    %94 = vst [vmem:[#allocation2] sm:$0xff] %v86
    %95 = vst [vmem:[#allocation3] sm:$0xff] %v87
    %96 = vst [vmem:[#allocation4] sm:$0xff] %v89
    %97 = vst [vmem:[#allocation5] sm:$0xff] %v91
    %98 = vst [vmem:[#allocation6] sm:$0xff] %v93
    // Predicated region
    $region22: #{tpu_custom_call.1} parent=1 // pred_check
      %p99 = pneg %p35
    $region23: #{tpu_custom_call.1} parent=1 // pred_check_branch
      %101 = sbr.rel (%p99) target = $region25
    $region24: #{tpu_custom_call.1} parent=1 // pred_region
      %v102 = vld [vmem:[#allocation2] sm:$0xff]
      %103 = vadd.xlane.f32.xlu0 %v102
      %v104 = vpop.xlane.xlu0 %103
      %v105 = vld [vmem:[#allocation3] sm:$0xff]
      %106 = vadd.xlane.f32.xlu0 %v105
      %v107 = vpop.xlane.xlu0 %106
      %v108 = vld [vmem:[#allocation4] sm:$0xff]
      %109 = vadd.xlane.f32.xlu0 %v108
      %v110 = vpop.xlane.xlu0 %109
      %v111 = vld [vmem:[#allocation5] sm:$0xff]
      %112 = vadd.xlane.f32.xlu0 %v111
      %v113 = vpop.xlane.xlu0 %112
      %v114 = vld [vmem:[#allocation6] sm:$0xff]
      %115 = vadd.xlane.f32.xlu0 %v114
      %v116 = vpop.xlane.xlu0 %115
      %v117 = vmul.f32 %v110, 500.0
      %v118 = vmul.f32 %v104, %v107
      %v119 = vsub.f32 %v117, %v118
      %v120 = vmul.f32 %v113, 500.0
      %v121 = vmul.f32 %v104, %v104
      %v122 = vsub.f32 %v120, %v121
      %v123 = vmul.f32 %v116, 500.0
      %v124 = vmul.f32 %v107, %v107
      %v125 = vsub.f32 %v123, %v124
      %v126 = vmul.f32 %v122, %v125
      %v127 = vrsqrt.pop %v126
      %v128 = vmul.f32 %v119, %v127
      %v129 = vsub.f32 1.0, %v128
      %vm130 = vcmask 7168
      %131 = vst.msk [vmem:[%s2] sm:$0xff] %vm130, %v129
    $region25: #{tpu_custom_call.1} parent=1 // pred_fallthru
      _
    // Predicated region
    $region26: #{tpu_custom_call.1} parent=1 // pred_check
      _
    $region27: #{tpu_custom_call.1} parent=1 // pred_check_branch
      %133 = sbr.rel (0) target = $region29
    $region28: #{tpu_custom_call.1} parent=1 // pred_region
      _
    $region29: #{tpu_custom_call.1} parent=1 // pred_fallthru
      _
    // Predicated region
    $region30: #{tpu_custom_call.1} parent=1 // pred_check
      _
    $region31: #{tpu_custom_call.1} parent=1 // pred_check_branch
      %135 = sbr.rel (0) target = $region33
    $region32: #{tpu_custom_call.1} parent=1 // pred_region
      _
    $region33: #{tpu_custom_call.1} parent=1 // pred_fallthru
      _
    %136 = vsyncpa [#allocation8], 1
    %137 = vsyncpa [#allocation10], 1

</llo_original>
